<compile_context>
chip_gen: v7x
topology: tpu7x:2x2x1
jax: 0.10.0
libtpu: 0.0.40
codegen_flags: <defaults>
</compile_context>

<pallas_src>
import jax
import jax.numpy as jnp
from jax.experimental import pallas as pl
from jax.experimental.pallas import tpu as pltpu


def _seg_head_kernel(x_ref, w1_ref, t1_ref, w2_ref, t2_ref, w3_ref, b3_ref,
                     o_ref):
    # x_ref block: (1, C_in, tile_n); weights pre-transposed to (C_out, C_in);
    # biases are (C_out, 1) columns broadcast along the lane dim.
    x = x_ref[0]                                              # (C_in, tile_n)

    # Stage 1: conv1 (1x1) with BN1 scale folded into the weight, + shift, ReLU.
    h = jnp.dot(w1_ref[...], x, preferred_element_type=jnp.float32)
    h = jnp.maximum(h + t1_ref[...], 0.0)

    # TODO(synk): Dropout is identity in eval mode; training-mode dropout
    # (pltpu.prng_random_bits masking) is not implemented here.

    # Stage 2: conv2 (1x1) + folded BN2 + ReLU.
    h = jnp.dot(w2_ref[...], h, preferred_element_type=jnp.float32)
    h = jnp.maximum(h + t2_ref[...], 0.0)

    # Stage 3: conv3 (1x1) + bias.
    out = jnp.dot(w3_ref[...], h, preferred_element_type=jnp.float32) + b3_ref[...]
    o_ref[0] = out.astype(o_ref.dtype)


def point_transformer_seg_head(x, folded_params, *, tile_n=512):
    """x: (B, C_in, N) f32 -> (B, part_dim, N) f32. Channel-major fused head."""
    B, C_in, N = x.shape
    w1t, t1, w2t, t2, w3t, b3 = folded_params
    P = w3t.shape[0]

    tile_n = min(tile_n, N)
    assert N % tile_n == 0, "N must be divisible by tile_n"
    assert tile_n % 128 == 0, "tile_n must be a multiple of 128 (lane dim)"
    assert C_in % 8 == 0, "C_in must be a multiple of 8 (sublane dim)"

    grid = (B, N // tile_n)

    def weight_spec(shape):
        # Constant-index small weights/biases, held resident across the grid.
        return pl.BlockSpec(shape, lambda b, j: tuple(0 for _ in shape))

    return pl.pallas_call(
        _seg_head_kernel,
        out_shape=jax.ShapeDtypeStruct((B, P, N), jnp.float32),
        grid_spec=pltpu.PrefetchScalarGridSpec(
            num_scalar_prefetch=0,
            grid=grid,
            in_specs=[
                pl.BlockSpec((1, C_in, tile_n), lambda b, j: (b, 0, j)),
                weight_spec(w1t.shape), weight_spec(t1.shape),
                weight_spec(w2t.shape), weight_spec(t2.shape),
                weight_spec(w3t.shape), weight_spec(b3.shape),
            ],
            out_specs=pl.BlockSpec((1, P, tile_n), lambda b, j: (b, 0, j)),
        ),
        compiler_params=pltpu.CompilerParams(
            dimension_semantics=("parallel", "parallel")),
    )(x, w1t, t1, w2t, t2, w3t, b3)


def make_raw_params(key, in_channels, hidden_dims, part_dim):
    """Deterministic synthetic conv/BN parameters (PyTorch layout analog)."""
    H0, H1 = hidden_dims
    ks = jax.random.split(key, 14)

    def conv_w(k, cin, cout):
        return jax.random.normal(k, (cin, cout), jnp.float32) / jnp.sqrt(cin)

    return dict(
        w1=conv_w(ks[0], in_channels, H0),
        b1=0.1 * jax.random.normal(ks[1], (H0,), jnp.float32),
        g1=1.0 + 0.1 * jax.random.normal(ks[2], (H0,), jnp.float32),
        beta1=0.1 * jax.random.normal(ks[3], (H0,), jnp.float32),
        mean1=0.05 * jax.random.normal(ks[4], (H0,), jnp.float32),
        var1=1.0 + 0.1 * jax.random.uniform(ks[5], (H0,), jnp.float32),
        w2=conv_w(ks[6], H0, H1),
        b2=0.1 * jax.random.normal(ks[7], (H1,), jnp.float32),
        g2=1.0 + 0.1 * jax.random.normal(ks[8], (H1,), jnp.float32),
        beta2=0.1 * jax.random.normal(ks[9], (H1,), jnp.float32),
        mean2=0.05 * jax.random.normal(ks[10], (H1,), jnp.float32),
        var2=1.0 + 0.1 * jax.random.uniform(ks[11], (H1,), jnp.float32),
        w3=conv_w(ks[12], H1, part_dim),
        b3=0.1 * jax.random.normal(ks[13], (part_dim,), jnp.float32),
    )


def fold_params(p, eps=1e-5):
    """Fold eval-mode BatchNorm into the conv weights/bias and pre-transpose
    weights to (C_out, C_in) for the channel-major kernel."""
    s1 = p["g1"] / jnp.sqrt(p["var1"] + eps)
    t1 = p["beta1"] + (p["b1"] - p["mean1"]) * s1
    s2 = p["g2"] / jnp.sqrt(p["var2"] + eps)
    t2 = p["beta2"] + (p["b2"] - p["mean2"]) * s2

    w1t = (p["w1"] * s1[None, :]).T          # (H0, C_in), BN scale folded in
    w2t = (p["w2"] * s2[None, :]).T          # (H1, H0)
    w3t = p["w3"].T                          # (P, H1)

    return (w1t, t1[:, None], w2t, t2[:, None], w3t, p["b3"][:, None])


def reference(x, p, eps=1e-5):
    """Plain-JAX reference of the PyTorch forward pass (eval mode, unfolded)."""
    def conv_bn_relu(h, w, b, g, beta, mean, var):
        h = jnp.einsum("bcn,ch->bhn", h, w) + b[None, :, None]
        h = (h - mean[None, :, None]) / jnp.sqrt(var[None, :, None] + eps)
        h = h * g[None, :, None] + beta[None, :, None]
        return jnp.maximum(h, 0.0)

    h = conv_bn_relu(x, p["w1"], p["b1"], p["g1"], p["beta1"], p["mean1"], p["var1"])
    h = conv_bn_relu(h, p["w2"], p["b2"], p["g2"], p["beta2"], p["mean2"], p["var2"])
    return jnp.einsum("bcn,ch->bhn", h, p["w3"]) + p["b3"][None, :, None]


if __name__ == "__main__":
    key = jax.random.PRNGKey(0)
    k_x, k_p = jax.random.split(key)

    B, C_in, N = 2, 16, 512
    hidden_dims = (32, 32)
    part_dim = 8

    x = jax.random.normal(k_x, (B, C_in, N), jnp.float32)
    raw = make_raw_params(k_p, C_in, hidden_dims, part_dim)
    folded = fold_params(raw)

    # tile_n=256 -> grid (2, 2): 4 parallel steps (keeps v7x megacore busy).
    out = point_transformer_seg_head(x, folded, tile_n=256)
    out = jax.block_until_ready(out)

    ref = reference(x, raw)
    assert out.shape == (B, part_dim, N), out.shape
    max_err = float(jnp.max(jnp.abs(out - ref)))
    assert jnp.allclose(out, ref, atol=1e-3, rtol=1e-3), (
        f"mismatch vs reference, max abs err {max_err}")

    print("KERNEL_OK")
</pallas_src>

<mosaic_0001>
module attributes {stable_mosaic.version = 11 : i64} {
  func.func @_seg_head_kernel(%arg0: i32, %arg1: i32, %arg2: memref<1x16x256xf32, #tpu.memory_space<vmem>>, %arg3: memref<32x16xf32, #tpu.memory_space<vmem>>, %arg4: memref<32x1xf32, #tpu.memory_space<vmem>>, %arg5: memref<32x32xf32, #tpu.memory_space<vmem>>, %arg6: memref<32x1xf32, #tpu.memory_space<vmem>>, %arg7: memref<8x32xf32, #tpu.memory_space<vmem>>, %arg8: memref<8x1xf32, #tpu.memory_space<vmem>>, %arg9: memref<1x8x256xf32, #tpu.memory_space<vmem>>) attributes {dimension_semantics = [#tpu.dimension_semantics<parallel>, #tpu.dimension_semantics<parallel>], iteration_bounds = array<i64: 2, 2>, scalar_prefetch = 0 : i64, scratch_operands = 0 : i64, tpu.core_type = #tpu.core_type<tc>, window_params = [{transform_indices = @transform_0, window_bounds = array<i64: 1, 16, 256>}, {pipeline_mode = #tpu.pipeline_mode<synchronous>, transform_indices = @transform_1, window_bounds = array<i64: 32, 16>}, {pipeline_mode = #tpu.pipeline_mode<synchronous>, transform_indices = @transform_2, window_bounds = array<i64: 32, 1>}, {pipeline_mode = #tpu.pipeline_mode<synchronous>, transform_indices = @transform_3, window_bounds = array<i64: 32, 32>}, {pipeline_mode = #tpu.pipeline_mode<synchronous>, transform_indices = @transform_4, window_bounds = array<i64: 32, 1>}, {pipeline_mode = #tpu.pipeline_mode<synchronous>, transform_indices = @transform_5, window_bounds = array<i64: 8, 32>}, {pipeline_mode = #tpu.pipeline_mode<synchronous>, transform_indices = @transform_6, window_bounds = array<i64: 8, 1>}, {transform_indices = @transform_7, window_bounds = array<i64: 1, 8, 256>}]} {
    %c0 = arith.constant 0 : index
    %c0_0 = arith.constant 0 : index
    %c0_1 = arith.constant 0 : index
    %0 = vector.load %arg2[%c0, %c0_0, %c0_1] : memref<1x16x256xf32, #tpu.memory_space<vmem>>, vector<1x16x256xf32>
    %1 = vector.shape_cast %0 : vector<1x16x256xf32> to vector<16x256xf32>
    %c0_2 = arith.constant 0 : index
    %c0_3 = arith.constant 0 : index
    %2 = vector.load %arg3[%c0_2, %c0_3] : memref<32x16xf32, #tpu.memory_space<vmem>>, vector<32x16xf32>
    %cst = arith.constant dense<0.000000e+00> : vector<32x256xf32>
    %3 = tpu.matmul %2, %1, %cst {dimension_numbers = #tpu.dot_dimension_numbers<[1], [0], [0], [1], [0, 0, 1, 1], [], []>} : vector<32x16xf32>, vector<16x256xf32>, vector<32x256xf32> -> vector<32x256xf32>
    %c0_4 = arith.constant 0 : index
    %c0_5 = arith.constant 0 : index
    %4 = vector.load %arg4[%c0_4, %c0_5] : memref<32x1xf32, #tpu.memory_space<vmem>>, vector<32x1xf32>
    %5 = vector.broadcast %4 : vector<32x1xf32> to vector<32x256xf32>
    %6 = arith.addf %3, %5 : vector<32x256xf32>
    %cst_6 = arith.constant 0.000000e+00 : f32
    %7 = vector.broadcast %cst_6 : f32 to vector<32x256xf32>
    %8 = arith.maximumf %6, %7 : vector<32x256xf32>
    %c0_7 = arith.constant 0 : index
    %c0_8 = arith.constant 0 : index
    %9 = vector.load %arg5[%c0_7, %c0_8] : memref<32x32xf32, #tpu.memory_space<vmem>>, vector<32x32xf32>
    %cst_9 = arith.constant dense<0.000000e+00> : vector<32x256xf32>
    %10 = tpu.matmul %9, %8, %cst_9 {dimension_numbers = #tpu.dot_dimension_numbers<[1], [0], [0], [1], [0, 0, 1, 1], [], []>} : vector<32x32xf32>, vector<32x256xf32>, vector<32x256xf32> -> vector<32x256xf32>
    %c0_10 = arith.constant 0 : index
    %c0_11 = arith.constant 0 : index
    %11 = vector.load %arg6[%c0_10, %c0_11] : memref<32x1xf32, #tpu.memory_space<vmem>>, vector<32x1xf32>
    %12 = vector.broadcast %11 : vector<32x1xf32> to vector<32x256xf32>
    %13 = arith.addf %10, %12 : vector<32x256xf32>
    %cst_12 = arith.constant 0.000000e+00 : f32
    %14 = vector.broadcast %cst_12 : f32 to vector<32x256xf32>
    %15 = arith.maximumf %13, %14 : vector<32x256xf32>
    %c0_13 = arith.constant 0 : index
    %c0_14 = arith.constant 0 : index
    %16 = vector.load %arg7[%c0_13, %c0_14] : memref<8x32xf32, #tpu.memory_space<vmem>>, vector<8x32xf32>
    %cst_15 = arith.constant dense<0.000000e+00> : vector<8x256xf32>
    %17 = tpu.matmul %16, %15, %cst_15 {dimension_numbers = #tpu.dot_dimension_numbers<[1], [0], [0], [1], [0, 0, 1, 1], [], []>} : vector<8x32xf32>, vector<32x256xf32>, vector<8x256xf32> -> vector<8x256xf32>
    %c0_16 = arith.constant 0 : index
    %c0_17 = arith.constant 0 : index
    %18 = vector.load %arg8[%c0_16, %c0_17] : memref<8x1xf32, #tpu.memory_space<vmem>>, vector<8x1xf32>
    %19 = vector.broadcast %18 : vector<8x1xf32> to vector<8x256xf32>
    %20 = arith.addf %17, %19 : vector<8x256xf32>
    %c0_18 = arith.constant 0 : index
    %c0_19 = arith.constant 0 : index
    %c0_20 = arith.constant 0 : index
    %21 = vector.load %arg9[%c0_18, %c0_19, %c0_20] : memref<1x8x256xf32, #tpu.memory_space<vmem>>, vector<1x8x256xf32>
    %22 = vector.shape_cast %21 : vector<1x8x256xf32> to vector<8x256xf32>
    %23 = vector.shape_cast %20 : vector<8x256xf32> to vector<1x8x256xf32>
    tpu.vector_store %arg9[%c0_18, %c0_19, %c0_20], %23 {strides = array<i32>} : memref<1x8x256xf32, #tpu.memory_space<vmem>>, vector<1x8x256xf32>,
    return
  }
  func.func @transform_0(%arg0: i32, %arg1: i32) -> (i32, i32, i32) {
    %c0_i32 = arith.constant 0 : i32
    %c0_i32_0 = arith.constant 0 : i32
    return %arg0, %c0_i32, %arg1 : i32, i32, i32
  }
  func.func @transform_1(%arg0: i32, %arg1: i32) -> (i32, i32) {
    %c0_i32 = arith.constant 0 : i32
    %c0_i32_0 = arith.constant 0 : i32
    %c0_i32_1 = arith.constant 0 : i32
    return %c0_i32, %c0_i32_0 : i32, i32
  }
  func.func @transform_2(%arg0: i32, %arg1: i32) -> (i32, i32) {
    %c0_i32 = arith.constant 0 : i32
    %c0_i32_0 = arith.constant 0 : i32
    %c0_i32_1 = arith.constant 0 : i32
    return %c0_i32, %c0_i32_0 : i32, i32
  }
  func.func @transform_3(%arg0: i32, %arg1: i32) -> (i32, i32) {
    %c0_i32 = arith.constant 0 : i32
    %c0_i32_0 = arith.constant 0 : i32
    %c0_i32_1 = arith.constant 0 : i32
    return %c0_i32, %c0_i32_0 : i32, i32
  }
  func.func @transform_4(%arg0: i32, %arg1: i32) -> (i32, i32) {
    %c0_i32 = arith.constant 0 : i32
    %c0_i32_0 = arith.constant 0 : i32
    %c0_i32_1 = arith.constant 0 : i32
    return %c0_i32, %c0_i32_0 : i32, i32
  }
  func.func @transform_5(%arg0: i32, %arg1: i32) -> (i32, i32) {
    %c0_i32 = arith.constant 0 : i32
    %c0_i32_0 = arith.constant 0 : i32
    %c0_i32_1 = arith.constant 0 : i32
    return %c0_i32, %c0_i32_0 : i32, i32
  }
  func.func @transform_6(%arg0: i32, %arg1: i32) -> (i32, i32) {
    %c0_i32 = arith.constant 0 : i32
    %c0_i32_0 = arith.constant 0 : i32
    %c0_i32_1 = arith.constant 0 : i32
    return %c0_i32, %c0_i32_0 : i32, i32
  }
  func.func @transform_7(%arg0: i32, %arg1: i32) -> (i32, i32, i32) {
    %c0_i32 = arith.constant 0 : i32
    %c0_i32_0 = arith.constant 0 : i32
    return %arg0, %c0_i32, %arg1 : i32, i32, i32
  }
}

</mosaic_0001>

<llo_original>
// kernel: tpu_custom_call.1
$region0: #{tpu_custom_call.1}
  #allocation0 [shape = 'u32[]', space=smem, size = 0x4, offset = 0x4, fixed_abs, tag = 'smem constant byte address 0x4 - core index']
  #allocation1 [shape = 'u32[144,128]{1,0:T(1,128)}', space=vmem, size = 0x12000, scoped, tag = 'internal scratch']
  %s0 = inlined_call_operand.hbm [shape: f32[2,16,512], index: 0, kind: input, shape index: {}]
  %s1 = inlined_call_operand.vmem [shape: f32[32,16], index: 1, kind: input, shape index: {}]
  %s2 = inlined_call_operand.vmem [shape: f32[32,1], index: 2, kind: input, shape index: {}]
  %s3 = inlined_call_operand.vmem [shape: f32[32,32], index: 3, kind: input, shape index: {}]
  %s4 = inlined_call_operand.vmem [shape: f32[32,1], index: 4, kind: input, shape index: {}]
  %s5 = inlined_call_operand.vmem [shape: f32[8,32], index: 5, kind: input, shape index: {}]
  %s6 = inlined_call_operand.vmem [shape: f32[8,1], index: 6, kind: input, shape index: {}]
  %s7 = inlined_call_operand.hbm [shape: f32[2,8,512], index: 7, kind: output, shape index: {}]
  %s8 = sld [smem:[#allocation0]]
  $region65: #{tpu_custom_call.1} parent=0
    _
  %s10 = ssub.s32 1, %s8
  %s11 = scalar_select 0, %s10, %s8
  $region1: #{tpu_custom_call.1} parent=0
    #allocation2 [shape = 'u8[32768]{0}', space=vmem, size = 0x8000, scoped, tag = 'input window, operand 0']
    #allocation3 [shape = 's32[2]{0}', space=sflag, size = 0x8, scoped, tag = 'scoped memory for tpu_custom_call.1']
    #allocation4 [shape = 's32[2]{0}', space=sflag, size = 0x8, scoped, tag = 'scoped memory for tpu_custom_call.1']
    #allocation5 [shape = 'u8[16384]{0}', space=vmem, size = 0x4000, scoped, tag = 'output window, operand 0']
    %12 = vsyncpa [#allocation3], 0
    %s13 = scalar_lea.sflag [#allocation3], 1
    %14 = vsyncpa %s13, 0
    %15 = vsyncpa [#allocation4], 0
    %s16 = scalar_lea.sflag [#allocation4], 1
    %17 = vsyncpa %s16, 0
    loop: start=0, step=1, limit=6
    $region2: #{tpu_custom_call.1} parent=1 // loop_pre_header
      _
    $region3: #{tpu_custom_call.1} parent=1 // loop_header
      %s19 = sphi 0, %s23
      %p20 = scmp.ge.s32.totalorder %s19, 6
      %s26 = sphi 0, %s38
      %s27 = sphi 0, %s34
      %s28 = sphi 0, %s26
      %s29 = sphi 0, %s27
      %s30 = sphi 0, %s28
      %s31 = sphi 0, %s29
      %s43 = sphi 0, %s45
      %s46 = sphi 0, %s43
      %s47 = sphi 0, %s46
      %s63 = sphi 0, %s47
      %s67 = sphi 0, %s67
      %s69 = sphi 0, %s67
      %s70 = sphi 0, %s69
      %s84 = sphi 0, %s70
      %s88 = sphi 0, %s88
      %s90 = sphi 0, %s88
      %s91 = sphi 0, %s90
      %s105 = sphi 0, %s91
      %s109 = sphi 0, %s109
      %s111 = sphi 0, %s109
      %s112 = sphi 0, %s111
      %s126 = sphi 0, %s112
      %s130 = sphi 0, %s130
      %s132 = sphi 0, %s130
      %s133 = sphi 0, %s132
      %s147 = sphi 0, %s133
      %s151 = sphi 0, %s151
      %s153 = sphi 0, %s151
      %s154 = sphi 0, %s153
      %s168 = sphi 0, %s154
      %s172 = sphi 0, %s172
      %s174 = sphi 0, %s172
      %s175 = sphi 0, %s174
      %s189 = sphi 0, %s175
      %s197 = sphi 0, %s199
      %s200 = sphi 0, %s197
      %s201 = sphi 0, %s200
      %s217 = sphi 0, %s201
    $region4: #{tpu_custom_call.1} parent=1 // loop_header_branch
      %22 = sbr.rel (%p20) target = $region8
    $region5: #{tpu_custom_call.1} parent=1 // loop_body
      %s24 = ssub.s32 %s19, 1
      %s25 = ssub.s32 %s19, 2
      %s32 = sadd.s32 1, %s27
      %p33 = scmp.ge.s32.totalorder %s32, 2
      %s34 = scalar_select %p33, 0, %s32
      %s35 = sadd.s32 1, %s26
      %s36 = scalar_select %p33, %s35, %s26
      %p37 = scmp.ge.s32.totalorder %s36, 2
      %s38 = scalar_select %p37, 0, %s36
      %s39 = ssub.s32 %s26, %s38
      %s40 = ssub.s32 %s27, %s34
      %s41 = sor.u32 %s39, %s40
      %p42 = scmp.eq.s32.totalorder %s41, 0
      %s44 = sadd.s32 %s43, 1
      %s45 = scalar_select %p42, %s43, %s44
      %p48 = pneg %p42
      %p49 = scmp.eq.s32.totalorder %s19, 3
      %p50 = por %p48, %p49
      %p51 = scmp.ne.s32.totalorder %s43, %s46
      %p52 = scmp.eq.s32.totalorder %s19, 0
      %p53 = por %p51, %p52
      %p54 = scmp.ne.s32.totalorder %s43, %s46
      %p55 = scmp.eq.s32.totalorder %s24, 3
      %p56 = por %p54, %p55
      %p57 = scmp.ne.s32.totalorder %s46, %s47
      %p58 = scmp.eq.s32.totalorder %s24, 0
      %p59 = por %p57, %p58
      %p60 = scmp.ne.s32.totalorder %s46, %s47
      %p61 = scmp.eq.s32.totalorder %s25, 3
      %p62 = por %p60, %p61
      %p64 = scmp.ne.s32.totalorder %s47, %s63
      %p65 = scmp.eq.s32.totalorder %s25, 0
      %p66 = por %p64, %p65
      %s68 = sadd.s32 %s67, 1
      %p71 = scmp.eq.s32.totalorder %s19, 3
      %p72 = scmp.ne.s32.totalorder %s67, %s69
      %p73 = scmp.eq.s32.totalorder %s19, 0
      %p74 = por %p72, %p73
      %p75 = scmp.ne.s32.totalorder %s67, %s69
      %p76 = scmp.eq.s32.totalorder %s24, 3
      %p77 = por %p75, %p76
      %p78 = scmp.ne.s32.totalorder %s69, %s70
      %p79 = scmp.eq.s32.totalorder %s24, 0
      %p80 = por %p78, %p79
      %p81 = scmp.ne.s32.totalorder %s69, %s70
      %p82 = scmp.eq.s32.totalorder %s25, 3
      %p83 = por %p81, %p82
      %p85 = scmp.ne.s32.totalorder %s70, %s84
      %p86 = scmp.eq.s32.totalorder %s25, 0
      %p87 = por %p85, %p86
      %s89 = sadd.s32 %s88, 1
      %p92 = scmp.eq.s32.totalorder %s19, 3
      %p93 = scmp.ne.s32.totalorder %s88, %s90
      %p94 = scmp.eq.s32.totalorder %s19, 0
      %p95 = por %p93, %p94
      %p96 = scmp.ne.s32.totalorder %s88, %s90
      %p97 = scmp.eq.s32.totalorder %s24, 3
      %p98 = por %p96, %p97
      %p99 = scmp.ne.s32.totalorder %s90, %s91
      %p100 = scmp.eq.s32.totalorder %s24, 0
      %p101 = por %p99, %p100
      %p102 = scmp.ne.s32.totalorder %s90, %s91
      %p103 = scmp.eq.s32.totalorder %s25, 3
      %p104 = por %p102, %p103
      %p106 = scmp.ne.s32.totalorder %s91, %s105
      %p107 = scmp.eq.s32.totalorder %s25, 0
      %p108 = por %p106, %p107
      %s110 = sadd.s32 %s109, 1
      %p113 = scmp.eq.s32.totalorder %s19, 3
      %p114 = scmp.ne.s32.totalorder %s109, %s111
      %p115 = scmp.eq.s32.totalorder %s19, 0
      %p116 = por %p114, %p115
      %p117 = scmp.ne.s32.totalorder %s109, %s111
      %p118 = scmp.eq.s32.totalorder %s24, 3
      %p119 = por %p117, %p118
      %p120 = scmp.ne.s32.totalorder %s111, %s112
      %p121 = scmp.eq.s32.totalorder %s24, 0
      %p122 = por %p120, %p121
      %p123 = scmp.ne.s32.totalorder %s111, %s112
      %p124 = scmp.eq.s32.totalorder %s25, 3
      %p125 = por %p123, %p124
      %p127 = scmp.ne.s32.totalorder %s112, %s126
      %p128 = scmp.eq.s32.totalorder %s25, 0
      %p129 = por %p127, %p128
      %s131 = sadd.s32 %s130, 1
      %p134 = scmp.eq.s32.totalorder %s19, 3
      %p135 = scmp.ne.s32.totalorder %s130, %s132
      %p136 = scmp.eq.s32.totalorder %s19, 0
      %p137 = por %p135, %p136
      %p138 = scmp.ne.s32.totalorder %s130, %s132
      %p139 = scmp.eq.s32.totalorder %s24, 3
      %p140 = por %p138, %p139
      %p141 = scmp.ne.s32.totalorder %s132, %s133
      %p142 = scmp.eq.s32.totalorder %s24, 0
      %p143 = por %p141, %p142
      %p144 = scmp.ne.s32.totalorder %s132, %s133
      %p145 = scmp.eq.s32.totalorder %s25, 3
      %p146 = por %p144, %p145
      %p148 = scmp.ne.s32.totalorder %s133, %s147
      %p149 = scmp.eq.s32.totalorder %s25, 0
      %p150 = por %p148, %p149
      %s152 = sadd.s32 %s151, 1
      %p155 = scmp.eq.s32.totalorder %s19, 3
      %p156 = scmp.ne.s32.totalorder %s151, %s153
      %p157 = scmp.eq.s32.totalorder %s19, 0
      %p158 = por %p156, %p157
      %p159 = scmp.ne.s32.totalorder %s151, %s153
      %p160 = scmp.eq.s32.totalorder %s24, 3
      %p161 = por %p159, %p160
      %p162 = scmp.ne.s32.totalorder %s153, %s154
      %p163 = scmp.eq.s32.totalorder %s24, 0
      %p164 = por %p162, %p163
      %p165 = scmp.ne.s32.totalorder %s153, %s154
      %p166 = scmp.eq.s32.totalorder %s25, 3
      %p167 = por %p165, %p166
      %p169 = scmp.ne.s32.totalorder %s154, %s168
      %p170 = scmp.eq.s32.totalorder %s25, 0
      %p171 = por %p169, %p170
      %s173 = sadd.s32 %s172, 1
      %p176 = scmp.eq.s32.totalorder %s19, 3
      %p177 = scmp.ne.s32.totalorder %s172, %s174
      %p178 = scmp.eq.s32.totalorder %s19, 0
      %p179 = por %p177, %p178
      %p180 = scmp.ne.s32.totalorder %s172, %s174
      %p181 = scmp.eq.s32.totalorder %s24, 3
      %p182 = por %p180, %p181
      %p183 = scmp.ne.s32.totalorder %s174, %s175
      %p184 = scmp.eq.s32.totalorder %s24, 0
      %p185 = por %p183, %p184
      %p186 = scmp.ne.s32.totalorder %s174, %s175
      %p187 = scmp.eq.s32.totalorder %s25, 3
      %p188 = por %p186, %p187
      %p190 = scmp.ne.s32.totalorder %s175, %s189
      %p191 = scmp.eq.s32.totalorder %s25, 0
      %p192 = por %p190, %p191
      %s193 = ssub.s32 %s26, %s38
      %s194 = ssub.s32 %s27, %s34
      %s195 = sor.u32 %s193, %s194
      %p196 = scmp.eq.s32.totalorder %s195, 0
      %s198 = sadd.s32 %s197, 1
      %s199 = scalar_select %p196, %s197, %s198
      %p202 = pneg %p196
      %p203 = scmp.eq.s32.totalorder %s19, 3
      %p204 = por %p202, %p203
      %p205 = scmp.ne.s32.totalorder %s197, %s200
      %p206 = scmp.eq.s32.totalorder %s19, 0
      %p207 = por %p205, %p206
      %p208 = scmp.ne.s32.totalorder %s197, %s200
      %p209 = scmp.eq.s32.totalorder %s24, 3
      %p210 = por %p208, %p209
      %p211 = scmp.ne.s32.totalorder %s200, %s201
      %p212 = scmp.eq.s32.totalorder %s24, 0
      %p213 = por %p211, %p212
      %p214 = scmp.ne.s32.totalorder %s200, %s201
      %p215 = scmp.eq.s32.totalorder %s25, 3
      %p216 = por %p214, %p215
      %p218 = scmp.ne.s32.totalorder %s201, %s217
      %p219 = scmp.eq.s32.totalorder %s25, 0
      %p220 = por %p218, %p219
      %p221 = scmp.le.s32.totalorder 1, %s19
      %p222 = scmp.lt.s32.totalorder %s19, 5
      %p223 = pnand %p221, %p222
      %p224 = pneg %p223
      // Predicated region
      $region9: #{tpu_custom_call.1} parent=5 // pred_check
        _
      $region10: #{tpu_custom_call.1} parent=5 // pred_check_branch
        %226 = sbr.rel (%p223) target = $region12
      $region11: #{tpu_custom_call.1} parent=5 // pred_region
        %s227 = ssub.s32 %s19, 1
        // Predicated region
        $region13: #{tpu_custom_call.1} parent=11 // pred_check
          %p228 = pneg %p80
        $region14: #{tpu_custom_call.1} parent=11 // pred_check_branch
          %230 = sbr.rel (%p228) target = $region16
        $region15: #{tpu_custom_call.1} parent=11 // pred_region
          _
        $region16: #{tpu_custom_call.1} parent=11 // pred_fallthru
          _
        // Predicated region
        $region17: #{tpu_custom_call.1} parent=11 // pred_check
          %p231 = pneg %p101
        $region18: #{tpu_custom_call.1} parent=11 // pred_check_branch
          %233 = sbr.rel (%p231) target = $region20
        $region19: #{tpu_custom_call.1} parent=11 // pred_region
          _
        $region20: #{tpu_custom_call.1} parent=11 // pred_fallthru
          _
        // Predicated region
        $region21: #{tpu_custom_call.1} parent=11 // pred_check
          %p234 = pneg %p122
        $region22: #{tpu_custom_call.1} parent=11 // pred_check_branch
          %236 = sbr.rel (%p234) target = $region24
        $region23: #{tpu_custom_call.1} parent=11 // pred_region
          _
        $region24: #{tpu_custom_call.1} parent=11 // pred_fallthru
          _
        // Predicated region
        $region25: #{tpu_custom_call.1} parent=11 // pred_check
          %p237 = pneg %p143
        $region26: #{tpu_custom_call.1} parent=11 // pred_check_branch
          %239 = sbr.rel (%p237) target = $region28
        $region27: #{tpu_custom_call.1} parent=11 // pred_region
          _
        $region28: #{tpu_custom_call.1} parent=11 // pred_fallthru
          _
        // Predicated region
        $region29: #{tpu_custom_call.1} parent=11 // pred_check
          %p240 = pneg %p164
        $region30: #{tpu_custom_call.1} parent=11 // pred_check_branch
          %242 = sbr.rel (%p240) target = $region32
        $region31: #{tpu_custom_call.1} parent=11 // pred_region
          _
        $region32: #{tpu_custom_call.1} parent=11 // pred_fallthru
          _
        // Predicated region
        $region33: #{tpu_custom_call.1} parent=11 // pred_check
          %p243 = pneg %p185
        $region34: #{tpu_custom_call.1} parent=11 // pred_check_branch
          %245 = sbr.rel (%p243) target = $region36
        $region35: #{tpu_custom_call.1} parent=11 // pred_region
          _
        $region36: #{tpu_custom_call.1} parent=11 // pred_fallthru
          _
      $region12: #{tpu_custom_call.1} parent=5 // pred_fallthru
        _
      %p246 = scmp.lt.s32.totalorder %s19, 4
      // Predicated region
      $region37: #{tpu_custom_call.1} parent=5 // pred_check
        %p247 = pneg %p246
      $region38: #{tpu_custom_call.1} parent=5 // pred_check_branch
        %249 = sbr.rel (%p247) target = $region40
      $region39: #{tpu_custom_call.1} parent=5 // pred_region
        // Predicated region
        $region41: #{tpu_custom_call.1} parent=39 // pred_check
          %p250 = pneg %p53
        $region42: #{tpu_custom_call.1} parent=39 // pred_check_branch
          %252 = sbr.rel (%p250) target = $region44
        $region43: #{tpu_custom_call.1} parent=39 // pred_region
          %s253 = sand.u32 %s43, 1
          %s254 = scalar_lea.sflag [#allocation3], %s253
          %s255 = sand.u32 %s43, 1
          %s256 = smul.addr %s255, 32
          %s257 = scalar_lea.vmem [#allocation2], %s256
          %s258 = smul.u32 2, %s27
          %s260 = ssub.s32 512, 512
          %261 = vsyncadd %s254, %s260
          %s262 = smul.addr %s26, 8
          %s263 = sadd.s32 %s258, %s262
          %s264 = smul.addr %s263, 128
          %s265 = scalar_lea.hbm %s0, %s264
          %s266 = sshll.u32 %s257, 4
          %s267 = int_to_ptr.vmem [resolvable:$true] %s266
          %272 = dma.hbm_to_vmem [thread:$0]  %s265, 512, %s267, %s254, 512, 256, 16
        $region44: #{tpu_custom_call.1} parent=39 // pred_fallthru
          _
      $region40: #{tpu_custom_call.1} parent=5 // pred_fallthru
        _
      %p273 = scmp.le.s32.totalorder 1, %s19
      %p274 = scmp.lt.s32.totalorder %s19, 5
      %p275 = pnand %p273, %p274
      %p276 = pneg %p275
      // Predicated region
      $region45: #{tpu_custom_call.1} parent=5 // pred_check
        _
      $region46: #{tpu_custom_call.1} parent=5 // pred_check_branch
        %278 = sbr.rel (%p275) target = $region48
      $region47: #{tpu_custom_call.1} parent=5 // pred_region
        %s279 = ssub.s32 %s19, 1
        %s280 = sand.u32 %s46, 1
        %s281 = scalar_lea.sflag [#allocation3], %s280
        %s282 = sand.u32 %s46, 1
        %s283 = smul.addr %s282, 32
        %s284 = scalar_lea.vmem [#allocation2], %s283
        // Predicated region
        $region49: #{tpu_custom_call.1} parent=47 // pred_check
          %p285 = pneg %p59
        $region50: #{tpu_custom_call.1} parent=47 // pred_check_branch
          %287 = sbr.rel (%p285) target = $region52
        $region51: #{tpu_custom_call.1} parent=47 // pred_region
          %288 = dma.done %s281, 512
        $region52: #{tpu_custom_call.1} parent=47 // pred_fallthru
          _
        %s289 = sand.u32 %s46, 1
        %s290 = scalar_lea.sflag [#allocation3], %s289
        %s291 = sand.u32 %s46, 1
        %s292 = smul.addr %s291, 32
        %s293 = scalar_lea.vmem [#allocation2], %s292
        %p294 = pneg %p59
        %p295 = pneg %p56
        %p296 = pneg %p80
        %p297 = pneg %p77
        %p298 = pneg %p101
        %p299 = pneg %p98
        %p300 = pneg %p122
        %p301 = pneg %p119
        %p302 = pneg %p143
        %p303 = pneg %p140
        %p304 = pneg %p164
        %p305 = pneg %p161
        %p306 = pneg %p185
        %p307 = pneg %p182
        %p308 = pneg %p213
        %p309 = pneg %p210
        %s310 = sand.u32 %s200, 1
        %s311 = scalar_lea.sflag [#allocation4], %s310
        %s312 = sand.u32 %s200, 1
        %s313 = smul.addr %s312, 16
        %s314 = scalar_lea.vmem [#allocation5], %s313
        %s315 = smul.u32 2, %s29
        %s316 = smul.u32 2, %s29
        %v317 = vld [vmem:[%s284] sm:$0xff]
        %v318 = vld [vmem:[%s284 + $0x8] sm:$0xff]
        %v319 = vld [vmem:[%s284 + $0x10] sm:$0xff]
        %v320 = vld [vmem:[%s284 + $0x18] sm:$0xff]
        %v321 = vld [vmem:[%s1] sm:$0xff]
        %v322 = vld [vmem:[%s1 + $0x8] sm:$0xff]
        %v323 = vld [vmem:[%s1 + $0x10] sm:$0xff]
        %v324 = vld [vmem:[%s1 + $0x18] sm:$0xff]
        %v325 = vld [vmem:[%s2] sm:$0xff]
        %v326 = vld [vmem:[%s2 + $0x8] sm:$0xff]
        %v327 = vld [vmem:[%s2 + $0x10] sm:$0xff]
        %v328 = vld [vmem:[%s2 + $0x18] sm:$0xff]
        %330 = vset.pattern.permute.xlu0 0
        %331 = vperm.xlu0 %330, %v325
        %v332 = vpop.permute.xlu0 %331
        %335 = vset.pattern.permute.xlu0 0
        %336 = vperm.xlu0 %335, %v326
        %v337 = vpop.permute.xlu0 %336
        %340 = vset.pattern.permute.xlu0 0
        %341 = vperm.xlu0 %340, %v327
        %v342 = vpop.permute.xlu0 %341
        %345 = vset.pattern.permute.xlu0 0
        %346 = vperm.xlu0 %345, %v328
        %v347 = vpop.permute.xlu0 %346
        %vm349 = vcmask 130048
        %v351 = vsel %vm349, %v321, 0
        %v354 = vsel %vm349, %v322, 0
        %v357 = vsel %vm349, %v323, 0
        %v360 = vsel %vm349, %v324, 0
        %362 = vmatprep.subr.mxu0 %v318
        %363 = vmatpush1.msra.mxu0 %v317
        %364 = vmatprep.subr.mxu0 %v320
        %365 = vmatpush1.msra.mxu0 %v319
        %366 = vmatprep.subr.mxu0 0.0
        %367 = vmatpush1.msra.mxu0 0.0
        %368 = vmatprep.subr.mxu0 0.0
        %369 = vmatpush1.msra.mxu0 0.0
        %370 = vmatprep.subr.mxu0 0.0
        %371 = vmatpush1.msra.mxu0 0.0
        %372 = vmatprep.subr.mxu0 0.0
        %373 = vmatpush1.msra.mxu0 0.0
        %374 = vmatprep.subr.mxu0 0.0
        %375 = vmatpush1.msra.mxu0 0.0
        %376 = vmatprep.subr.mxu0 0.0
        %377 = vmatpush1.msra.mxu0 0.0
        %378 = vmatprep.subr.mxu0 0.0
        %379 = vmatpush1.msra.mxu0 0.0
        %380 = vmatprep.subr.mxu0 0.0
        %381 = vmatpush1.msra.mxu0 0.0
        %382 = vmatprep.subr.mxu0 0.0
        %383 = vmatpush1.msra.mxu0 0.0
        %384 = vmatprep.subr.mxu0 0.0
        %385 = vmatpush1.msra.mxu0 0.0
        %386 = vmatprep.subr.mxu0 0.0
        %387 = vmatpush1.msra.mxu0 0.0
        %388 = vmatprep.subr.mxu0 0.0
        %389 = vmatpush1.msra.mxu0 0.0
        %390 = vmatprep.subr.mxu0 0.0
        %391 = vmatpush1.msra.mxu0 0.0
        %392 = vmatprep.subr.mxu0 0.0
        %393 = vmatpush1.msra.mxu0 0.0
        %394 = vmatprep.subr.mxu0 0.0
        %395 = vmatpush1.msra.mxu0 0.0
        %396 = vmatprep.subr.mxu0 0.0
        %397 = vmatpush1.msra.mxu0 0.0
        %398 = vmatprep.subr.mxu0 0.0
        %399 = vmatpush1.msra.mxu0 0.0
        %400 = vmatprep.subr.mxu0 0.0
        %401 = vmatpush1.msra.mxu0 0.0
        %402 = vmatprep.subr.mxu0 0.0
        %403 = vmatpush1.msra.mxu0 0.0
        %404 = vmatprep.subr.mxu0 0.0
        %405 = vmatpush1.msra.mxu0 0.0
        %406 = vmatprep.subr.mxu0 0.0
        %407 = vmatpush1.msra.mxu0 0.0
        %408 = vmatprep.subr.mxu0 0.0
        %409 = vmatpush1.msra.mxu0 0.0
        %410 = vmatprep.subr.mxu0 0.0
        %411 = vmatpush1.msra.mxu0 0.0
        %412 = vmatprep.subr.mxu0 0.0
        %413 = vmatpush1.msra.mxu0 0.0
        %414 = vmatprep.subr.mxu0 0.0
        %415 = vmatpush1.msra.mxu0 0.0
        %416 = vmatprep.subr.mxu0 0.0
        %417 = vmatpush1.msra.mxu0 0.0
        %418 = vmatprep.subr.mxu0 0.0
        %419 = vmatpush1.msra.mxu0 0.0
        %420 = vmatprep.subr.mxu0 0.0
        %421 = vmatpush1.msra.mxu0 0.0
        %422 = vmatprep.subr.mxu0 0.0
        %423 = vmatpush1.msra.mxu0 0.0
        %424 = vmatprep.subr.mxu0 0.0
        %425 = vmatpush1.msra.mxu0 0.0
        %426 = vmatprep.mubr.f32.mxu0 0.0
        %427 = vmatmul.mubr.f32.gmra.mrb[0].mxu0 %v351
        %v428 = vpop.f32.mrb[0].mxu0
        %v429 = vadd.f32 %v332, %v428
        %v430 = vpop.f32.mrb[0].mxu0
        %v431 = vadd.f32 %v332, %v430
        %432 = vmatprep.mubr.f32.mxu0 0.0
        %433 = vmatmul.mubr.f32.gmra.mrb[0].mxu0 %v354
        %v434 = vpop.f32.mrb[0].mxu0
        %v435 = vadd.f32 %v337, %v434
        %v436 = vpop.f32.mrb[0].mxu0
        %v437 = vadd.f32 %v337, %v436
        %438 = vmatprep.mubr.f32.mxu0 0.0
        %439 = vmatmul.mubr.f32.gmra.mrb[0].mxu0 %v357
        %v440 = vpop.f32.mrb[0].mxu0
        %v441 = vadd.f32 %v342, %v440
        %v442 = vpop.f32.mrb[0].mxu0
        %v443 = vadd.f32 %v342, %v442
        %444 = vmatprep.mubr.f32.mxu0 0.0
        %445 = vmatmul.mubr.f32.gmra.mrb[0].mxu0 %v360
        %v446 = vpop.f32.mrb[0].mxu0
        %v447 = vadd.f32 %v347, %v446
        %v448 = vpop.f32.mrb[0].mxu0
        %v449 = vadd.f32 %v347, %v448
        %450 = vdwg.mxu0
        %v451 = vmax.f32 %v429, 0.0
        %v452 = vmax.f32 %v431, 0.0
        %v453 = vmax.f32 %v435, 0.0
        %v454 = vmax.f32 %v437, 0.0
        %v455 = vmax.f32 %v441, 0.0
        %v456 = vmax.f32 %v443, 0.0
        %v457 = vmax.f32 %v447, 0.0
        %v458 = vmax.f32 %v449, 0.0
        %v459 = vld [vmem:[%s3] sm:$0xff]
        %v460 = vld [vmem:[%s3 + $0x8] sm:$0xff]
        %v461 = vld [vmem:[%s3 + $0x10] sm:$0xff]
        %v462 = vld [vmem:[%s3 + $0x18] sm:$0xff]
        %v463 = vld [vmem:[%s4] sm:$0xff]
        %v464 = vld [vmem:[%s4 + $0x8] sm:$0xff]
        %v465 = vld [vmem:[%s4 + $0x10] sm:$0xff]
        %v466 = vld [vmem:[%s4 + $0x18] sm:$0xff]
        %468 = vset.pattern.permute.xlu0 0
        %469 = vperm.xlu0 %468, %v463
        %v470 = vpop.permute.xlu0 %469
        %473 = vset.pattern.permute.xlu0 0
        %474 = vperm.xlu0 %473, %v464
        %v475 = vpop.permute.xlu0 %474
        %478 = vset.pattern.permute.xlu0 0
        %479 = vperm.xlu0 %478, %v465
        %v480 = vpop.permute.xlu0 %479
        %483 = vset.pattern.permute.xlu0 0
        %484 = vperm.xlu0 %483, %v466
        %v485 = vpop.permute.xlu0 %484
        %vm487 = vcmask 261120
        %v489 = vsel %vm487, %v459, 0
        %v492 = vsel %vm487, %v460, 0
        %v495 = vsel %vm487, %v461, 0
        %v498 = vsel %vm487, %v462, 0
        %500 = vmatprep.subr.mxu0 %v452
        %501 = vmatpush1.msra.mxu0 %v451
        %502 = vmatprep.subr.mxu0 %v454
        %503 = vmatpush1.msra.mxu0 %v453
        %504 = vmatprep.subr.mxu0 %v456
        %505 = vmatpush1.msra.mxu0 %v455
        %506 = vmatprep.subr.mxu0 %v458
        %507 = vmatpush1.msra.mxu0 %v457
        %508 = vmatprep.subr.mxu0 0.0
        %509 = vmatpush1.msra.mxu0 0.0
        %510 = vmatprep.subr.mxu0 0.0
        %511 = vmatpush1.msra.mxu0 0.0
        %512 = vmatprep.subr.mxu0 0.0
        %513 = vmatpush1.msra.mxu0 0.0
        %514 = vmatprep.subr.mxu0 0.0
        %515 = vmatpush1.msra.mxu0 0.0
        %516 = vmatprep.subr.mxu0 0.0
        %517 = vmatpush1.msra.mxu0 0.0
        %518 = vmatprep.subr.mxu0 0.0
        %519 = vmatpush1.msra.mxu0 0.0
        %520 = vmatprep.subr.mxu0 0.0
        %521 = vmatpush1.msra.mxu0 0.0
        %522 = vmatprep.subr.mxu0 0.0
        %523 = vmatpush1.msra.mxu0 0.0
        %524 = vmatprep.subr.mxu0 0.0
        %525 = vmatpush1.msra.mxu0 0.0
        %526 = vmatprep.subr.mxu0 0.0
        %527 = vmatpush1.msra.mxu0 0.0
        %528 = vmatprep.subr.mxu0 0.0
        %529 = vmatpush1.msra.mxu0 0.0
        %530 = vmatprep.subr.mxu0 0.0
        %531 = vmatpush1.msra.mxu0 0.0
        %532 = vmatprep.subr.mxu0 0.0
        %533 = vmatpush1.msra.mxu0 0.0
        %534 = vmatprep.subr.mxu0 0.0
        %535 = vmatpush1.msra.mxu0 0.0
        %536 = vmatprep.subr.mxu0 0.0
        %537 = vmatpush1.msra.mxu0 0.0
        %538 = vmatprep.subr.mxu0 0.0
        %539 = vmatpush1.msra.mxu0 0.0
        %540 = vmatprep.subr.mxu0 0.0
        %541 = vmatpush1.msra.mxu0 0.0
        %542 = vmatprep.subr.mxu0 0.0
        %543 = vmatpush1.msra.mxu0 0.0
        %544 = vmatprep.subr.mxu0 0.0
        %545 = vmatpush1.msra.mxu0 0.0
        %546 = vmatprep.subr.mxu0 0.0
        %547 = vmatpush1.msra.mxu0 0.0
        %548 = vmatprep.subr.mxu0 0.0
        %549 = vmatpush1.msra.mxu0 0.0
        %550 = vmatprep.subr.mxu0 0.0
        %551 = vmatpush1.msra.mxu0 0.0
        %552 = vmatprep.subr.mxu0 0.0
        %553 = vmatpush1.msra.mxu0 0.0
        %554 = vmatprep.subr.mxu0 0.0
        %555 = vmatpush1.msra.mxu0 0.0
        %556 = vmatprep.subr.mxu0 0.0
        %557 = vmatpush1.msra.mxu0 0.0
        %558 = vmatprep.subr.mxu0 0.0
        %559 = vmatpush1.msra.mxu0 0.0
        %560 = vmatprep.subr.mxu0 0.0
        %561 = vmatpush1.msra.mxu0 0.0
        %562 = vmatprep.subr.mxu0 0.0
        %563 = vmatpush1.msra.mxu0 0.0
        %564 = vmatprep.mubr.f32.mxu0 0.0
        %565 = vmatmul.mubr.f32.gmra.mrb[0].mxu0 %v489
        %v566 = vpop.f32.mrb[0].mxu0
        %v567 = vadd.f32 %v470, %v566
        %v568 = vpop.f32.mrb[0].mxu0
        %v569 = vadd.f32 %v470, %v568
        %570 = vmatprep.mubr.f32.mxu0 0.0
        %571 = vmatmul.mubr.f32.gmra.mrb[0].mxu0 %v492
        %v572 = vpop.f32.mrb[0].mxu0
        %v573 = vadd.f32 %v475, %v572
        %v574 = vpop.f32.mrb[0].mxu0
        %v575 = vadd.f32 %v475, %v574
        %576 = vmatprep.mubr.f32.mxu0 0.0
        %577 = vmatmul.mubr.f32.gmra.mrb[0].mxu0 %v495
        %v578 = vpop.f32.mrb[0].mxu0
        %v579 = vadd.f32 %v480, %v578
        %v580 = vpop.f32.mrb[0].mxu0
        %v581 = vadd.f32 %v480, %v580
        %582 = vmatprep.mubr.f32.mxu0 0.0
        %583 = vmatmul.mubr.f32.gmra.mrb[0].mxu0 %v498
        %v584 = vpop.f32.mrb[0].mxu0
        %v585 = vadd.f32 %v485, %v584
        %v586 = vpop.f32.mrb[0].mxu0
        %v587 = vadd.f32 %v485, %v586
        %588 = vdwg.mxu0
        %v589 = vmax.f32 %v567, 0.0
        %v590 = vmax.f32 %v569, 0.0
        %v591 = vmax.f32 %v573, 0.0
        %v592 = vmax.f32 %v575, 0.0
        %v593 = vmax.f32 %v579, 0.0
        %v594 = vmax.f32 %v581, 0.0
        %v595 = vmax.f32 %v585, 0.0
        %v596 = vmax.f32 %v587, 0.0
        %v597 = vld [vmem:[%s5] sm:$0xff]
        %v598 = vld [vmem:[%s6] sm:$0xff]
        %600 = vset.pattern.permute.xlu0 0
        %601 = vperm.xlu0 %600, %v598
        %v602 = vpop.permute.xlu0 %601
        %v605 = vsel %vm487, %v597, 0
        %607 = vmatprep.subr.mxu0 %v590
        %608 = vmatpush1.msra.mxu0 %v589
        %609 = vmatprep.subr.mxu0 %v592
        %610 = vmatpush1.msra.mxu0 %v591
        %611 = vmatprep.subr.mxu0 %v594
        %612 = vmatpush1.msra.mxu0 %v593
        %613 = vmatprep.subr.mxu0 %v596
        %614 = vmatpush1.msra.mxu0 %v595
        %615 = vmatprep.subr.mxu0 0.0
        %616 = vmatpush1.msra.mxu0 0.0
        %617 = vmatprep.subr.mxu0 0.0
        %618 = vmatpush1.msra.mxu0 0.0
        %619 = vmatprep.subr.mxu0 0.0
        %620 = vmatpush1.msra.mxu0 0.0
        %621 = vmatprep.subr.mxu0 0.0
        %622 = vmatpush1.msra.mxu0 0.0
        %623 = vmatprep.subr.mxu0 0.0
        %624 = vmatpush1.msra.mxu0 0.0
        %625 = vmatprep.subr.mxu0 0.0
        %626 = vmatpush1.msra.mxu0 0.0
        %627 = vmatprep.subr.mxu0 0.0
        %628 = vmatpush1.msra.mxu0 0.0
        %629 = vmatprep.subr.mxu0 0.0
        %630 = vmatpush1.msra.mxu0 0.0
        %631 = vmatprep.subr.mxu0 0.0
        %632 = vmatpush1.msra.mxu0 0.0
        %633 = vmatprep.subr.mxu0 0.0
        %634 = vmatpush1.msra.mxu0 0.0
        %635 = vmatprep.subr.mxu0 0.0
        %636 = vmatpush1.msra.mxu0 0.0
        %637 = vmatprep.subr.mxu0 0.0
        %638 = vmatpush1.msra.mxu0 0.0
        %639 = vmatprep.subr.mxu0 0.0
        %640 = vmatpush1.msra.mxu0 0.0
        %641 = vmatprep.subr.mxu0 0.0
        %642 = vmatpush1.msra.mxu0 0.0
        %643 = vmatprep.subr.mxu0 0.0
        %644 = vmatpush1.msra.mxu0 0.0
        %645 = vmatprep.subr.mxu0 0.0
        %646 = vmatpush1.msra.mxu0 0.0
        %647 = vmatprep.subr.mxu0 0.0
        %648 = vmatpush1.msra.mxu0 0.0
        %649 = vmatprep.subr.mxu0 0.0
        %650 = vmatpush1.msra.mxu0 0.0
        %651 = vmatprep.subr.mxu0 0.0
        %652 = vmatpush1.msra.mxu0 0.0
        %653 = vmatprep.subr.mxu0 0.0
        %654 = vmatpush1.msra.mxu0 0.0
        %655 = vmatprep.subr.mxu0 0.0
        %656 = vmatpush1.msra.mxu0 0.0
        %657 = vmatprep.subr.mxu0 0.0
        %658 = vmatpush1.msra.mxu0 0.0
        %659 = vmatprep.subr.mxu0 0.0
        %660 = vmatpush1.msra.mxu0 0.0
        %661 = vmatprep.subr.mxu0 0.0
        %662 = vmatpush1.msra.mxu0 0.0
        %663 = vmatprep.subr.mxu0 0.0
        %664 = vmatpush1.msra.mxu0 0.0
        %665 = vmatprep.subr.mxu0 0.0
        %666 = vmatpush1.msra.mxu0 0.0
        %667 = vmatprep.subr.mxu0 0.0
        %668 = vmatpush1.msra.mxu0 0.0
        %669 = vmatprep.subr.mxu0 0.0
        %670 = vmatpush1.msra.mxu0 0.0
        %671 = vmatprep.mubr.f32.mxu0 0.0
        %672 = vmatmul.mubr.f32.gmra.mrb[0].mxu0 %v605
        %v673 = vpop.f32.mrb[0].mxu0
        %v674 = vadd.f32 %v602, %v673
        %v675 = vpop.f32.mrb[0].mxu0
        %v676 = vadd.f32 %v602, %v675
        %677 = vdwg.mxu0
        %678 = vst [vmem:[%s314] sm:$0xff] %v674
        %679 = vst [vmem:[%s314 + $0x8] sm:$0xff] %v676
        %s680 = sand.u32 %s200, 1
        %s681 = scalar_lea.sflag [#allocation4], %s680
        %s682 = sand.u32 %s200, 1
        %s683 = smul.addr %s682, 16
        %s684 = scalar_lea.vmem [#allocation5], %s683
        // Predicated region
        $region53: #{tpu_custom_call.1} parent=47 // pred_check
          %p685 = pneg %p210
        $region54: #{tpu_custom_call.1} parent=47 // pred_check_branch
          %687 = sbr.rel (%p685) target = $region56
        $region55: #{tpu_custom_call.1} parent=47 // pred_region
          %s688 = smul.u32 2, %s29
          %s690 = ssub.s32 256, 256
          %691 = vsyncadd %s681, %s690
          %s692 = smul.addr %s28, 4
          %s693 = sadd.s32 %s688, %s692
          %s694 = smul.addr %s693, 128
          %s695 = scalar_lea.hbm %s7, %s694
          %s697 = sshll.u32 %s684, 4
          %s698 = int_to_ptr.vmem [resolvable:$true] %s697
          %700 = dma.vmem_to_hbm [thread:$0]  %s698, 256, %s695, %s681
        $region56: #{tpu_custom_call.1} parent=47 // pred_fallthru
          _
      $region48: #{tpu_custom_call.1} parent=5 // pred_fallthru
        _
      %p701 = scmp.le.s32.totalorder 2, %s19
      // Predicated region
      $region57: #{tpu_custom_call.1} parent=5 // pred_check
        %p702 = pneg %p701
      $region58: #{tpu_custom_call.1} parent=5 // pred_check_branch
        %704 = sbr.rel (%p702) target = $region60
      $region59: #{tpu_custom_call.1} parent=5 // pred_region
        %s705 = ssub.s32 %s19, 2
        // Predicated region
        $region61: #{tpu_custom_call.1} parent=59 // pred_check
          %p706 = pneg %p216
        $region62: #{tpu_custom_call.1} parent=59 // pred_check_branch
          %708 = sbr.rel (%p706) target = $region64
        $region63: #{tpu_custom_call.1} parent=59 // pred_region
          %s709 = sand.u32 %s201, 1
          %s710 = scalar_lea.sflag [#allocation4], %s709
          %s711 = sand.u32 %s201, 1
          %s712 = smul.addr %s711, 16
          %s713 = scalar_lea.vmem [#allocation5], %s712
          %714 = dma.done %s710, 256
        $region64: #{tpu_custom_call.1} parent=59 // pred_fallthru
          _
      $region60: #{tpu_custom_call.1} parent=5 // pred_fallthru
        _
    $region6: #{tpu_custom_call.1} parent=1 // loop_footer
      %s23 = sadd.s32 1, %s19
    $region7: #{tpu_custom_call.1} parent=1 // loop_footer_branch
      %18 = sbr.rel target = $region3
    $region8: #{tpu_custom_call.1} parent=1 // loop_exit
      _
    %715 = vsyncpa [#allocation3], 1
    %s716 = scalar_lea.sflag [#allocation3], 1
    %717 = vsyncpa %s716, 1
    %718 = vsyncpa [#allocation4], 1
    %s719 = scalar_lea.sflag [#allocation4], 1
    %720 = vsyncpa %s719, 1

</llo_original>
